<compile_context>
chip_gen: v7x
topology: tpu7x:2x2x1
jax: 0.10.0
libtpu: 0.0.40
codegen_flags: <defaults>
</compile_context>

<pallas_src>
import math

import jax
import jax.numpy as jnp
from jax.experimental import pallas as pl
from jax.experimental.pallas import tpu as pltpu


def _softplus_powerlaw_kernel(p_ref, d_ref, o_ref):
    # p_ref: (n_heads, 1, 1) VMEM -- precomputed -softplus(log_p)
    # d_ref: (tm, LANE)      VMEM -- sublane/lane-dense spatial tile of d
    # o_ref: (n_heads, tm, LANE) VMEM -- per-head outputs for this tile
    x = d_ref[...]
    lg = jnp.log(x)

    maxv = jnp.finfo(x.dtype).max
    minv = jnp.finfo(x.dtype).min
    # torch.nan_to_num(log(d), nan=finfo.max): NaN->max, +inf->max, -inf->min.
    # NaN and +inf both fail (lg < inf), so one select covers both.
    lg = jnp.where(lg < jnp.inf, lg, maxv)
    lg = jnp.where(lg == -jnp.inf, minv, lg)

    # One log/cleanup pass per tile reused by every head; negation already
    # folded into p in the wrapper.
    o_ref[...] = p_ref[...] * lg[None, :, :]


def _round_up(x, m):
    return ((x + m - 1) // m) * m


def _choose_tm(rows, lane, n_heads, batch, itemsize,
               vmem_budget_bytes=24 * 1024 * 1024):
    """Rows per block. True double-buffered footprint per grid step is
    2 * (d block + out block) = 2 * (1 + n_heads) * tm * lane * itemsize
    (both blocks are already (8,128)-aligned, so no hidden sublane padding)."""
    per_row = 2 * (1 + n_heads) * lane * itemsize
    tm = vmem_budget_bytes // per_row
    tm = min(tm, 1024, (rows // 8) * 8)
    tm = max(8, (tm // 8) * 8)
    # Keep at least ~8 grid steps so both v7x TensorCores get work.
    while tm > 8 and batch * ((rows + tm - 1) // tm) < 8:
        tm = max(8, ((tm // 2) // 8) * 8)
    return tm


def softplus_negative_power_law(d, log_p):
    """d: (B, L1, L2), log_p: (n_heads, 1) -> (B, n_heads, L1, L2)."""
    B, L1, L2 = d.shape
    n_heads = log_p.shape[0]
    N = L1 * L2
    dtype = d.dtype
    itemsize = jnp.dtype(dtype).itemsize

    # Hoisted out of the kernel: softplus over n_heads scalars, with the output
    # negation folded in so the kernel never negates per element.
    p = (-jax.nn.softplus(log_p.astype(jnp.float32))).astype(dtype)
    p = p.reshape(n_heads, 1, 1)

    # Lane width: 512 keeps per-(head,row) output DMA runs >= 2 KiB; use 128
    # for small inputs so padding overhead stays negligible.
    lane = 512 if N >= 8 * 512 else 128
    # Lane-dense last dim + at least 8 sublane rows (pad <= lane-1 elements for
    # realistic shapes; padded log values are cleaned in-kernel and sliced off).
    n_pad = max(_round_up(N, lane), 8 * lane)
    rows = n_pad // lane

    d_flat = d.reshape(B, N)
    if n_pad != N:
        d_flat = jnp.pad(d_flat, ((0, 0), (0, n_pad - N)), constant_values=1.0)
    d_rows = d_flat.reshape(B, rows, lane)

    tm = _choose_tm(rows, lane, n_heads, B, itemsize)
    grid = (B, pl.cdiv(rows, tm))

    out_rows = pl.pallas_call(
        _softplus_powerlaw_kernel,
        out_shape=jax.ShapeDtypeStruct((B, n_heads, rows, lane), dtype),
        grid=grid,
        in_specs=[
            # whole (n_heads, 1, 1) precomputed -softplus weights, same block
            # every step
            pl.BlockSpec((n_heads, 1, 1), lambda b, t: (0, 0, 0)),
            # one sublane/lane-dense spatial tile per (batch, row-tile) step
            pl.BlockSpec((None, tm, lane), lambda b, t: (b, t, 0)),
        ],
        # all heads batched into one output block (batch dim squeezed)
        out_specs=pl.BlockSpec((None, n_heads, tm, lane),
                               lambda b, t: (b, 0, t, 0)),
        compiler_params=pltpu.CompilerParams(
            dimension_semantics=("parallel", "parallel"),
            # above v5e's 16 MiB scoped default, well under v7x's 64 MiB
            # physical VMEM; actual double-buffered footprint is <= ~24 MiB.
            vmem_limit_bytes=48 * 1024 * 1024,
        ),
    )(p, d_rows)

    out = out_rows.reshape(B, n_heads, n_pad)[:, :, :N]
    return out.reshape(B, n_heads, L1, L2)


def _reference(d, log_p):
    # ±inf -> ±finfo by jnp.nan_to_num defaults, NaN -> finfo.max explicitly
    lg = jnp.nan_to_num(jnp.log(d), nan=jnp.finfo(d.dtype).max)
    p = jax.nn.softplus(log_p)                       # (n_heads, 1)
    out = -(lg[..., None] * p[:, 0])                 # (B, L1, L2, n_heads)
    return jnp.transpose(out, (0, 3, 1, 2))          # (B, n_heads, L1, L2)


if __name__ == "__main__":
    B, n_heads, L = 2, 4, 16

    key = jax.random.PRNGKey(0)
    k_param, k_data = jax.random.split(key)

    # Deterministic xavier_uniform-style init for log_p of shape (n_heads, 1):
    # bound = sqrt(6 / (fan_in + fan_out)) = sqrt(6 / (1 + n_heads))
    bound = math.sqrt(6.0 / (1 + n_heads))
    log_p = jax.random.uniform(
        k_param, (n_heads, 1), jnp.float32, minval=-bound, maxval=bound
    )

    # positive distances d, with one exact zero to exercise the -inf path
    d = jax.random.uniform(k_data, (B, L, L), jnp.float32, minval=0.0, maxval=10.0)
    d = d.at[0, 0, 0].set(0.0)

    out = softplus_negative_power_law(d, log_p)
    jax.block_until_ready(out)

    assert out.shape == (B, n_heads, L, L)
    ref = _reference(d, log_p)
    assert bool(jnp.allclose(out, ref, rtol=1e-5, atol=1e-5))
    print("KERNEL_OK")
</pallas_src>

<mosaic_0001>
module attributes {stable_mosaic.version = 11 : i64} {
  func.func @_softplus_powerlaw_kernel(%arg0: i32, %arg1: i32, %arg2: memref<4x1x1xf32, #tpu.memory_space<vmem>>, %arg3: memref<1x8x128xf32, #tpu.memory_space<vmem>>, %arg4: memref<1x4x8x128xf32, #tpu.memory_space<vmem>>) attributes {dimension_semantics = [#tpu.dimension_semantics<parallel>, #tpu.dimension_semantics<parallel>], iteration_bounds = array<i64: 2, 1>, scalar_prefetch = 0 : i64, scratch_operands = 0 : i64, tpu.core_type = #tpu.core_type<tc>, window_params = [{pipeline_mode = #tpu.pipeline_mode<synchronous>, transform_indices = @transform_0, window_bounds = array<i64: 4, 1, 1>}, {transform_indices = @transform_1, window_bounds = array<i64: 1, 8, 128>}, {transform_indices = @transform_2, window_bounds = array<i64: 1, 4, 8, 128>}]} {
    %c0 = arith.constant 0 : index
    %c0_0 = arith.constant 0 : index
    %c0_1 = arith.constant 0 : index
    %0 = vector.load %arg3[%c0, %c0_0, %c0_1] : memref<1x8x128xf32, #tpu.memory_space<vmem>>, vector<1x8x128xf32>
    %1 = vector.shape_cast %0 : vector<1x8x128xf32> to vector<8x128xf32>
    %2 = math.log %1 : vector<8x128xf32>
    %cst = arith.constant 0x7F800000 : f32
    %3 = vector.broadcast %cst : f32 to vector<8x128xf32>
    %4 = arith.cmpf olt, %2, %3 : vector<8x128xf32>
    %cst_2 = arith.constant 3.40282347E+38 : f32
    %5 = vector.broadcast %cst_2 : f32 to vector<8x128xf32>
    %6 = arith.select %4, %2, %5 : vector<8x128xi1>, vector<8x128xf32>
    %cst_3 = arith.constant 0xFF800000 : f32
    %7 = vector.broadcast %cst_3 : f32 to vector<8x128xf32>
    %8 = arith.cmpf oeq, %6, %7 : vector<8x128xf32>
    %cst_4 = arith.constant -3.40282347E+38 : f32
    %9 = vector.broadcast %cst_4 : f32 to vector<8x128xf32>
    %10 = arith.select %8, %9, %6 : vector<8x128xi1>, vector<8x128xf32>
    %c0_5 = arith.constant 0 : index
    %c0_6 = arith.constant 0 : index
    %c0_7 = arith.constant 0 : index
    %11 = vector.load %arg2[%c0_5, %c0_6, %c0_7] : memref<4x1x1xf32, #tpu.memory_space<vmem>>, vector<4x1x1xf32>
    %12 = vector.shape_cast %10 : vector<8x128xf32> to vector<1x8x128xf32>
    %13 = vector.broadcast %11 : vector<4x1x1xf32> to vector<4x8x128xf32>
    %14 = vector.broadcast %12 : vector<1x8x128xf32> to vector<4x8x128xf32>
    %15 = arith.mulf %13, %14 : vector<4x8x128xf32>
    %c0_8 = arith.constant 0 : index
    %c0_9 = arith.constant 0 : index
    %c0_10 = arith.constant 0 : index
    %c0_11 = arith.constant 0 : index
    %16 = vector.load %arg4[%c0_8, %c0_9, %c0_10, %c0_11] : memref<1x4x8x128xf32, #tpu.memory_space<vmem>>, vector<1x4x8x128xf32>
    %17 = vector.shape_cast %16 : vector<1x4x8x128xf32> to vector<4x8x128xf32>
    %18 = vector.shape_cast %15 : vector<4x8x128xf32> to vector<1x4x8x128xf32>
    tpu.vector_store %arg4[%c0_8, %c0_9, %c0_10, %c0_11], %18 {strides = array<i32>} : memref<1x4x8x128xf32, #tpu.memory_space<vmem>>, vector<1x4x8x128xf32>,
    return
  }
  func.func @transform_0(%arg0: i32, %arg1: i32) -> (i32, i32, i32) {
    %c0_i32 = arith.constant 0 : i32
    %c0_i32_0 = arith.constant 0 : i32
    %c0_i32_1 = arith.constant 0 : i32
    %c0_i32_2 = arith.constant 0 : i32
    return %c0_i32, %c0_i32_0, %c0_i32_1 : i32, i32, i32
  }
  func.func @transform_1(%arg0: i32, %arg1: i32) -> (i32, i32, i32) {
    %c0_i32 = arith.constant 0 : i32
    %c0_i32_0 = arith.constant 0 : i32
    return %arg0, %arg1, %c0_i32 : i32, i32, i32
  }
  func.func @transform_2(%arg0: i32, %arg1: i32) -> (i32, i32, i32, i32) {
    %c0_i32 = arith.constant 0 : i32
    %c0_i32_0 = arith.constant 0 : i32
    %c0_i32_1 = arith.constant 0 : i32
    return %arg0, %c0_i32, %arg1, %c0_i32_0 : i32, i32, i32, i32
  }
}

</mosaic_0001>

<llo_original>
// kernel: tpu_custom_call.1
$region0: #{tpu_custom_call.1}
  #allocation0 [shape = 'u32[]', space=smem, size = 0x4, offset = 0x4, fixed_abs, tag = 'smem constant byte address 0x4 - core index']
  #allocation1 [shape = 'u32[144,128]{1,0:T(1,128)}', space=vmem, size = 0x12000, scoped, tag = 'internal scratch']
  %s0 = inlined_call_operand.vmem [shape: f32[4,1,1], index: 0, kind: input, shape index: {}]
  %s1 = inlined_call_operand.hbm [shape: f32[2,8,128], index: 1, kind: input, shape index: {}]
  %s2 = inlined_call_operand.hbm [shape: f32[2,4,8,128], index: 2, kind: output, shape index: {}]
  %s3 = sld [smem:[#allocation0]]
  $region45: #{tpu_custom_call.1} parent=0
    _
  %s5 = ssub.s32 1, %s3
  %s6 = scalar_select 0, %s5, %s3
  $region1: #{tpu_custom_call.1} parent=0
    #allocation2 [shape = 'u8[8192]{0}', space=vmem, size = 0x2000, scoped, tag = 'input window, operand 1']
    #allocation3 [shape = 's32[2]{0}', space=sflag, size = 0x8, scoped, tag = 'scoped memory for tpu_custom_call.1']
    #allocation4 [shape = 's32[2]{0}', space=sflag, size = 0x8, scoped, tag = 'scoped memory for tpu_custom_call.1']
    #allocation5 [shape = 'u8[32768]{0}', space=vmem, size = 0x8000, scoped, tag = 'output window, operand 0']
    %7 = vsyncpa [#allocation3], 0
    %s8 = scalar_lea.sflag [#allocation3], 1
    %9 = vsyncpa %s8, 0
    %10 = vsyncpa [#allocation4], 0
    %s11 = scalar_lea.sflag [#allocation4], 1
    %12 = vsyncpa %s11, 0
    loop: start=0, step=1, limit=4
    $region2: #{tpu_custom_call.1} parent=1 // loop_pre_header
      _
    $region3: #{tpu_custom_call.1} parent=1 // loop_header
      %s14 = sphi 0, %s18
      %p15 = scmp.ge.s32.totalorder %s14, 4
      %s21 = sphi 0, %s33
      %s22 = sphi 0, %s29
      %s23 = sphi 0, %s21
      %s24 = sphi 0, %s22
      %s25 = sphi 0, %s23
      %s26 = sphi 0, %s24
      %s34 = sphi 0, %s34
      %s36 = sphi 0, %s34
      %s37 = sphi 0, %s36
      %s51 = sphi 0, %s37
      %s59 = sphi 0, %s61
      %s62 = sphi 0, %s59
      %s63 = sphi 0, %s62
      %s79 = sphi 0, %s63
      %s87 = sphi 0, %s89
      %s90 = sphi 0, %s87
      %s91 = sphi 0, %s90
      %s107 = sphi 0, %s91
    $region4: #{tpu_custom_call.1} parent=1 // loop_header_branch
      %17 = sbr.rel (%p15) target = $region8
    $region5: #{tpu_custom_call.1} parent=1 // loop_body
      %s19 = ssub.s32 %s14, 1
      %s20 = ssub.s32 %s14, 2
      %s27 = sadd.s32 1, %s22
      %p28 = scmp.ge.s32.totalorder %s27, 1
      %s29 = scalar_select %p28, 0, %s27
      %s30 = sadd.s32 1, %s21
      %s31 = scalar_select %p28, %s30, %s21
      %p32 = scmp.ge.s32.totalorder %s31, 2
      %s33 = scalar_select %p32, 0, %s31
      %s35 = sadd.s32 %s34, 1
      %p38 = scmp.eq.s32.totalorder %s14, 1
      %p39 = scmp.ne.s32.totalorder %s34, %s36
      %p40 = scmp.eq.s32.totalorder %s14, 0
      %p41 = por %p39, %p40
      %p42 = scmp.ne.s32.totalorder %s34, %s36
      %p43 = scmp.eq.s32.totalorder %s19, 1
      %p44 = por %p42, %p43
      %p45 = scmp.ne.s32.totalorder %s36, %s37
      %p46 = scmp.eq.s32.totalorder %s19, 0
      %p47 = por %p45, %p46
      %p48 = scmp.ne.s32.totalorder %s36, %s37
      %p49 = scmp.eq.s32.totalorder %s20, 1
      %p50 = por %p48, %p49
      %p52 = scmp.ne.s32.totalorder %s37, %s51
      %p53 = scmp.eq.s32.totalorder %s20, 0
      %p54 = por %p52, %p53
      %s55 = ssub.s32 %s21, %s33
      %s56 = ssub.s32 %s22, %s29
      %s57 = sor.u32 %s55, %s56
      %p58 = scmp.eq.s32.totalorder %s57, 0
      %s60 = sadd.s32 %s59, 1
      %s61 = scalar_select %p58, %s59, %s60
      %p64 = pneg %p58
      %p65 = scmp.eq.s32.totalorder %s14, 1
      %p66 = por %p64, %p65
      %p67 = scmp.ne.s32.totalorder %s59, %s62
      %p68 = scmp.eq.s32.totalorder %s14, 0
      %p69 = por %p67, %p68
      %p70 = scmp.ne.s32.totalorder %s59, %s62
      %p71 = scmp.eq.s32.totalorder %s19, 1
      %p72 = por %p70, %p71
      %p73 = scmp.ne.s32.totalorder %s62, %s63
      %p74 = scmp.eq.s32.totalorder %s19, 0
      %p75 = por %p73, %p74
      %p76 = scmp.ne.s32.totalorder %s62, %s63
      %p77 = scmp.eq.s32.totalorder %s20, 1
      %p78 = por %p76, %p77
      %p80 = scmp.ne.s32.totalorder %s63, %s79
      %p81 = scmp.eq.s32.totalorder %s20, 0
      %p82 = por %p80, %p81
      %s83 = ssub.s32 %s21, %s33
      %s84 = ssub.s32 %s22, %s29
      %s85 = sor.u32 %s83, %s84
      %p86 = scmp.eq.s32.totalorder %s85, 0
      %s88 = sadd.s32 %s87, 1
      %s89 = scalar_select %p86, %s87, %s88
      %p92 = pneg %p86
      %p93 = scmp.eq.s32.totalorder %s14, 1
      %p94 = por %p92, %p93
      %p95 = scmp.ne.s32.totalorder %s87, %s90
      %p96 = scmp.eq.s32.totalorder %s14, 0
      %p97 = por %p95, %p96
      %p98 = scmp.ne.s32.totalorder %s87, %s90
      %p99 = scmp.eq.s32.totalorder %s19, 1
      %p100 = por %p98, %p99
      %p101 = scmp.ne.s32.totalorder %s90, %s91
      %p102 = scmp.eq.s32.totalorder %s19, 0
      %p103 = por %p101, %p102
      %p104 = scmp.ne.s32.totalorder %s90, %s91
      %p105 = scmp.eq.s32.totalorder %s20, 1
      %p106 = por %p104, %p105
      %p108 = scmp.ne.s32.totalorder %s91, %s107
      %p109 = scmp.eq.s32.totalorder %s20, 0
      %p110 = por %p108, %p109
      %p111 = scmp.le.s32.totalorder 1, %s14
      %p112 = scmp.lt.s32.totalorder %s14, 3
      %p113 = pnand %p111, %p112
      %p114 = pneg %p113
      // Predicated region
      $region9: #{tpu_custom_call.1} parent=5 // pred_check
        _
      $region10: #{tpu_custom_call.1} parent=5 // pred_check_branch
        %116 = sbr.rel (%p113) target = $region12
      $region11: #{tpu_custom_call.1} parent=5 // pred_region
        %s117 = ssub.s32 %s14, 1
        // Predicated region
        $region13: #{tpu_custom_call.1} parent=11 // pred_check
          %p118 = pneg %p47
        $region14: #{tpu_custom_call.1} parent=11 // pred_check_branch
          %120 = sbr.rel (%p118) target = $region16
        $region15: #{tpu_custom_call.1} parent=11 // pred_region
          _
        $region16: #{tpu_custom_call.1} parent=11 // pred_fallthru
          _
      $region12: #{tpu_custom_call.1} parent=5 // pred_fallthru
        _
      %p121 = scmp.lt.s32.totalorder %s14, 2
      // Predicated region
      $region17: #{tpu_custom_call.1} parent=5 // pred_check
        %p122 = pneg %p121
      $region18: #{tpu_custom_call.1} parent=5 // pred_check_branch
        %124 = sbr.rel (%p122) target = $region20
      $region19: #{tpu_custom_call.1} parent=5 // pred_region
        // Predicated region
        $region21: #{tpu_custom_call.1} parent=19 // pred_check
          %p125 = pneg %p69
        $region22: #{tpu_custom_call.1} parent=19 // pred_check_branch
          %127 = sbr.rel (%p125) target = $region24
        $region23: #{tpu_custom_call.1} parent=19 // pred_region
          %s128 = sand.u32 %s59, 1
          %s129 = scalar_lea.sflag [#allocation3], %s128
          %s130 = sand.u32 %s59, 1
          %s131 = smul.addr %s130, 8
          %s132 = scalar_lea.vmem [#allocation2], %s131
          %s134 = ssub.s32 128, 128
          %135 = vsyncadd %s129, %s134
          %s136 = sadd.s32 %s22, %s21
          %s137 = smul.addr %s136, 128
          %s138 = scalar_lea.hbm %s1, %s137
          %s140 = sshll.u32 %s132, 4
          %s141 = int_to_ptr.vmem [resolvable:$true] %s140
          %143 = dma.hbm_to_vmem [thread:$0]  %s138, 128, %s141, %s129
        $region24: #{tpu_custom_call.1} parent=19 // pred_fallthru
          _
      $region20: #{tpu_custom_call.1} parent=5 // pred_fallthru
        _
      %p144 = scmp.le.s32.totalorder 1, %s14
      %p145 = scmp.lt.s32.totalorder %s14, 3
      %p146 = pnand %p144, %p145
      %p147 = pneg %p146
      // Predicated region
      $region25: #{tpu_custom_call.1} parent=5 // pred_check
        _
      $region26: #{tpu_custom_call.1} parent=5 // pred_check_branch
        %149 = sbr.rel (%p146) target = $region28
      $region27: #{tpu_custom_call.1} parent=5 // pred_region
        %s150 = ssub.s32 %s14, 1
        %s151 = sand.u32 %s62, 1
        %s152 = scalar_lea.sflag [#allocation3], %s151
        %s153 = sand.u32 %s62, 1
        %s154 = smul.addr %s153, 8
        %s155 = scalar_lea.vmem [#allocation2], %s154
        // Predicated region
        $region29: #{tpu_custom_call.1} parent=27 // pred_check
          %p156 = pneg %p75
        $region30: #{tpu_custom_call.1} parent=27 // pred_check_branch
          %158 = sbr.rel (%p156) target = $region32
        $region31: #{tpu_custom_call.1} parent=27 // pred_region
          %159 = dma.done %s152, 128
        $region32: #{tpu_custom_call.1} parent=27 // pred_fallthru
          _
        %p160 = pneg %p47
        %p161 = pneg %p44
        %s162 = sand.u32 %s62, 1
        %s163 = scalar_lea.sflag [#allocation3], %s162
        %s164 = sand.u32 %s62, 1
        %s165 = smul.addr %s164, 8
        %s166 = scalar_lea.vmem [#allocation2], %s165
        %p167 = pneg %p75
        %p168 = pneg %p72
        %p169 = pneg %p103
        %p170 = pneg %p100
        %s171 = sand.u32 %s90, 1
        %s172 = scalar_lea.sflag [#allocation4], %s171
        %s173 = sand.u32 %s90, 1
        %s174 = smul.addr %s173, 32
        %s175 = scalar_lea.vmem [#allocation5], %s174
        %v176 = vld [vmem:[%s155] sm:$0xff]
        %v177 = vlog2.pop %v176
        %v178 = vmul.f32 %v177, 0.6931472
        %vm179 = vcmp.lt.f32.partialorder %v178, inf
        %v180 = vsel %vm179, %v178, 3.4028235e+38
        %vm181 = vcmp.eq.f32.partialorder %v180, -inf
        %v182 = vsel %vm181, -3.4028235e+38, %v180
        %v183 = vld [vmem:[%s0] sm:$0x1]
        %v184 = vld [vmem:[%s0 + $0x1] sm:$0x1]
        %v185 = vld [vmem:[%s0 + $0x2] sm:$0x1]
        %v186 = vld [vmem:[%s0 + $0x3] sm:$0x1]
        %v191 = vlaneseq
        %v192 = vshrl.u32 %v191, 7
        %v193 = vsub.s32 0, %v192
        %v194 = vrot.slane %v183, %v193
        %v195 = vlaneseq
        %v196 = vshrl.u32 %v195, 7
        %v197 = vsub.s32 0, %v196
        %v198 = vrot.slane %v184, %v197
        %v199 = vlaneseq
        %v200 = vshrl.u32 %v199, 7
        %v201 = vsub.s32 0, %v200
        %v202 = vrot.slane %v185, %v201
        %v203 = vlaneseq
        %v204 = vshrl.u32 %v203, 7
        %v205 = vsub.s32 0, %v204
        %v206 = vrot.slane %v186, %v205
        %207 = vset.pattern.permute.xlu0 0
        %208 = vperm.xlu0 %207, %v194
        %v209 = vpop.permute.xlu0 %208
        %211 = vset.pattern.permute.xlu0 0
        %212 = vperm.xlu0 %211, %v198
        %v213 = vpop.permute.xlu0 %212
        %215 = vset.pattern.permute.xlu0 0
        %216 = vperm.xlu0 %215, %v202
        %v217 = vpop.permute.xlu0 %216
        %219 = vset.pattern.permute.xlu0 0
        %220 = vperm.xlu0 %219, %v206
        %v221 = vpop.permute.xlu0 %220
        %v223 = vmul.f32 %v209, %v182
        %v224 = vmul.f32 %v213, %v182
        %v225 = vmul.f32 %v217, %v182
        %v226 = vmul.f32 %v221, %v182
        %227 = vst [vmem:[%s175] sm:$0xff] %v223
        %228 = vst [vmem:[%s175 + $0x8] sm:$0xff] %v224
        %229 = vst [vmem:[%s175 + $0x10] sm:$0xff] %v225
        %230 = vst [vmem:[%s175 + $0x18] sm:$0xff] %v226
        %s231 = sand.u32 %s90, 1
        %s232 = scalar_lea.sflag [#allocation4], %s231
        %s233 = sand.u32 %s90, 1
        %s234 = smul.addr %s233, 32
        %s235 = scalar_lea.vmem [#allocation5], %s234
        // Predicated region
        $region33: #{tpu_custom_call.1} parent=27 // pred_check
          %p236 = pneg %p100
        $region34: #{tpu_custom_call.1} parent=27 // pred_check_branch
          %238 = sbr.rel (%p236) target = $region36
        $region35: #{tpu_custom_call.1} parent=27 // pred_region
          %s240 = ssub.s32 512, 512
          %241 = vsyncadd %s232, %s240
          %s242 = smul.addr %s23, 4
          %s243 = sadd.s32 %s24, %s242
          %s244 = smul.addr %s243, 128
          %s245 = scalar_lea.hbm %s2, %s244
          %s246 = sshll.u32 %s235, 4
          %s247 = int_to_ptr.vmem [resolvable:$true] %s246
          %252 = dma.vmem_to_hbm [thread:$0]  %s247, 512, %s245, %s232, 128, 128, 8
        $region36: #{tpu_custom_call.1} parent=27 // pred_fallthru
          _
      $region28: #{tpu_custom_call.1} parent=5 // pred_fallthru
        _
      %p253 = scmp.le.s32.totalorder 2, %s14
      // Predicated region
      $region37: #{tpu_custom_call.1} parent=5 // pred_check
        %p254 = pneg %p253
      $region38: #{tpu_custom_call.1} parent=5 // pred_check_branch
        %256 = sbr.rel (%p254) target = $region40
      $region39: #{tpu_custom_call.1} parent=5 // pred_region
        %s257 = ssub.s32 %s14, 2
        // Predicated region
        $region41: #{tpu_custom_call.1} parent=39 // pred_check
          %p258 = pneg %p106
        $region42: #{tpu_custom_call.1} parent=39 // pred_check_branch
          %260 = sbr.rel (%p258) target = $region44
        $region43: #{tpu_custom_call.1} parent=39 // pred_region
          %s261 = sand.u32 %s91, 1
          %s262 = scalar_lea.sflag [#allocation4], %s261
          %s263 = sand.u32 %s91, 1
          %s264 = smul.addr %s263, 32
          %s265 = scalar_lea.vmem [#allocation5], %s264
          %266 = dma.done %s262, 512
        $region44: #{tpu_custom_call.1} parent=39 // pred_fallthru
          _
      $region40: #{tpu_custom_call.1} parent=5 // pred_fallthru
        _
    $region6: #{tpu_custom_call.1} parent=1 // loop_footer
      %s18 = sadd.s32 1, %s14
    $region7: #{tpu_custom_call.1} parent=1 // loop_footer_branch
      %13 = sbr.rel target = $region3
    $region8: #{tpu_custom_call.1} parent=1 // loop_exit
      _
    %267 = vsyncpa [#allocation3], 1
    %s268 = scalar_lea.sflag [#allocation3], 1
    %269 = vsyncpa %s268, 1
    %270 = vsyncpa [#allocation4], 1
    %s271 = scalar_lea.sflag [#allocation4], 1
    %272 = vsyncpa %s271, 1

</llo_original>
